<compile_context>
chip_gen: v7x
topology: tpu7x:2x2x1
jax: 0.10.0
libtpu: 0.0.40
codegen_flags: <defaults>
</compile_context>

<pallas_src>
import jax
import jax.numpy as jnp
from jax.experimental import pallas as pl
from jax.experimental.pallas import tpu as pltpu


def _round_up(x, m):
    return ((x + m - 1) // m) * m


def _select_tm(M, d_pad, itemsize):
    """Row-tile size: ~4 MiB per fm_s buffer, capped per the tile-sweep data."""
    m8 = _round_up(max(M, 1), 8)
    budget_rows = max(8, (4 * 1024 * 1024) // (d_pad * itemsize))
    cap = max(8, min(512 if d_pad <= 512 else 256, (budget_rows // 8) * 8))
    num_tiles = -(-m8 // cap)
    if num_tiles == 1 and m8 > 8:
        # v7x megacore: keep >= 2 row tiles so the "parallel" axis can split.
        num_tiles = 2
    tm = _round_up(-(-m8 // num_tiles), 8)
    m_pad = _round_up(M, tm)
    return tm, m_pad


def _select_tn(N, d_aug, itemsize):
    """Col-tile size over fm_t rows: ~8 MiB per t_aug buffer, 128-aligned."""
    n128 = _round_up(max(N, 1), 128)
    budget_rows = max(128, (8 * 1024 * 1024) // (d_aug * itemsize))
    cap = max(128, min(2048, (budget_rows // 128) * 128))
    if n128 <= cap:
        tn = n128
    else:
        num = -(-n128 // cap)
        tn = _round_up(-(-n128 // num), 128)
    n_pad = _round_up(N, tn)
    return tn, n_pad


def _cl_kernel(fm_s_ref, t_aug_ref, tgt_s_ref, tgt_t_ref, out_ref, acc_ref):
    """Grid (row_tile i, col_tile k); col axis is the reduction ("arbitrary").

    fm_s_ref : (TM, D_pad)   native dtype, tiled over rows, constant over k
    t_aug_ref: (TN, D_aug)   native dtype, [ t | ||t||^2 | 1 | 0 ], tiled over k
    tgt_s_ref: (TM, 1)  i32  row labels (pad = -1)
    tgt_t_ref: (1, TN)  i32  col labels (pad = -2)
    out_ref  : (1, 8, 128) f32  per-row-tile partial sum (broadcast, lane-dense)
    acc_ref  : (TM, D_aug) f32  VMEM scratch accumulator for mask @ t_aug
    """
    k = pl.program_id(1)

    @pl.when(k == 0)
    def _():
        acc_ref[...] = jnp.zeros_like(acc_ref)

    # Same-class 0/1 mask — the only (TM, TN) temporary in the kernel.
    mask = (tgt_s_ref[...] == tgt_t_ref[...]).astype(t_aug_ref.dtype)

    # Single MXU matmul per grid step: accumulates mt, mtsq and rowsum at once.
    acc_ref[...] += jax.lax.dot_general(
        mask, t_aug_ref[...],
        (((1,), (0,)), ((), ())),
        preferred_element_type=jnp.float32)

    @pl.when(k == pl.num_programs(1) - 1)
    def _():
        d_pad = fm_s_ref.shape[1]
        prod = acc_ref[...]                                  # (TM, D_aug) f32
        mt = prod[:, :d_pad]                                 # sum_j m_ij * t_j
        mtsq = prod[:, d_pad:d_pad + 1]                      # sum_j m_ij * ||t_j||^2
        row_sum = prod[:, d_pad + 1:d_pad + 2]               # sum_j m_ij

        s = fm_s_ref[...].astype(jnp.float32)                # (TM, D_pad)
        # Fused single lane-reduction over D:
        #   sum_j m_ij ||s_i - t_j||^2
        #     = sum_d s_id * (s_id * rowsum_i - 2 * mt_id) + mtsq_i
        row_total = jnp.sum(s * (s * row_sum - 2.0 * mt),
                            axis=-1, keepdims=True) + mtsq   # (TM, 1)
        # rowsum == 0 only for padded rows (row_total == 0 there) -> yields 0.
        row_loss = row_total / jnp.maximum(row_sum, 1.0)     # (TM, 1)

        tile_sum = jnp.sum(row_loss, axis=0, keepdims=True)  # (1, 1)
        out_ref[...] = jnp.broadcast_to(tile_sum[None, :, :], out_ref.shape)


def _cl_total(fm_s, fm_t, tgt_s, targets):
    """Pallas-backed  sum_i [ sum_j mask_ij ||s_i - t_j||^2 / rowsum_i ]."""
    M, D = fm_s.shape
    N = fm_t.shape[0]
    itemsize = jnp.dtype(fm_t.dtype).itemsize

    d_pad = _round_up(D, 128)
    d_aug = d_pad + 128                      # room for [ ||t||^2 | 1 | zeros ]

    tm, m_pad = _select_tm(M, d_pad, jnp.dtype(fm_s.dtype).itemsize)
    tn, n_pad = _select_tn(N, d_aug, itemsize)
    num_m = m_pad // tm
    num_n = n_pad // tn

    # --- padded / augmented operands (built once per call, M/N-invariant) ---
    fm_s_p = jnp.zeros((m_pad, d_pad), fm_s.dtype).at[:M, :D].set(fm_s)
    tgt_s2 = jnp.full((m_pad, 1), -1, jnp.int32).at[:M, 0].set(
        tgt_s.astype(jnp.int32))
    tgt_t2 = jnp.full((1, n_pad), -2, jnp.int32).at[0, :N].set(
        targets.astype(jnp.int32))

    t_f32 = fm_t.astype(jnp.float32)
    t_aug = jnp.zeros((n_pad, d_aug), jnp.float32)
    t_aug = t_aug.at[:N, :D].set(t_f32)
    t_aug = t_aug.at[:N, d_pad].set(jnp.sum(t_f32 * t_f32, axis=-1))
    t_aug = t_aug.at[:N, d_pad + 1].set(1.0)
    t_aug = t_aug.astype(fm_t.dtype)

    partials = pl.pallas_call(
        _cl_kernel,
        out_shape=jax.ShapeDtypeStruct((num_m, 8, 128), jnp.float32),
        grid_spec=pltpu.PrefetchScalarGridSpec(
            num_scalar_prefetch=0,
            grid=(num_m, num_n),
            in_specs=[
                pl.BlockSpec((tm, d_pad), lambda i, k: (i, 0)),   # fm_s rows
                pl.BlockSpec((tn, d_aug), lambda i, k: (k, 0)),   # t_aug cols
                pl.BlockSpec((tm, 1), lambda i, k: (i, 0)),       # row labels
                pl.BlockSpec((1, tn), lambda i, k: (0, k)),       # col labels
            ],
            out_specs=pl.BlockSpec((1, 8, 128), lambda i, k: (i, 0, 0)),
            scratch_shapes=[pltpu.VMEM((tm, d_aug), jnp.float32)],
        ),
        compiler_params=pltpu.CompilerParams(
            dimension_semantics=("parallel", "arbitrary"),
            vmem_limit_bytes=64 * 1024 * 1024,   # tiles sized to stay well below
        ),
    )(fm_s_p, t_aug, tgt_s2, tgt_t2)

    return jnp.sum(partials[:, 0, 0])


def cl_loss(fm_s, fm_t, targets, fusion_true, multi_index=None):
    """Pallas-backed equivalent of CL.forward."""
    tgt_s = targets[multi_index] if fusion_true else targets
    total = _cl_total(fm_s, fm_t, tgt_s, targets)
    if fusion_true:
        return 7.0 * total / fm_t.shape[0]
    else:
        return total / fm_s.shape[0]          # loss_pos.sum(-1).mean()


def cl_ref(fm_s, fm_t, targets, fusion_true, multi_index=None):
    """Pure-JAX reference mirroring the PyTorch forward exactly."""
    tgt_s = targets[multi_index] if fusion_true else targets
    mask = tgt_s[:, None] - targets[None, :]
    self_mask_pos = 1.0 - (mask != 0).astype(jnp.float32)
    d = jnp.sum((fm_s[:, None, :] - fm_t[None, :, :]) ** 2, axis=-1)
    loss_pos = d * self_mask_pos / jnp.sum(self_mask_pos, axis=-1, keepdims=True)
    if fusion_true:
        return 7.0 * jnp.sum(loss_pos) / fm_t.shape[0]
    else:
        return jnp.mean(jnp.sum(loss_pos, axis=-1))


if __name__ == "__main__":
    key = jax.random.PRNGKey(0)
    k1, k2, k3, k4, k5, k6, k7, k8 = jax.random.split(key, 8)

    # --- test 1: aligned shapes (batch=8, hidden=32) ---
    N, D, NUM_CLASSES = 8, 32, 3
    fm_s = jax.random.normal(k1, (N, D), dtype=jnp.float32)
    fm_t = jax.random.normal(k2, (N, D), dtype=jnp.float32)
    targets = jax.random.randint(k3, (N,), 0, NUM_CLASSES, dtype=jnp.int32)
    multi_index = jax.random.randint(k4, (N,), 0, N, dtype=jnp.int32)

    out_nf = cl_loss(fm_s, fm_t, targets, fusion_true=False)
    ref_nf = cl_ref(fm_s, fm_t, targets, fusion_true=False)
    out_f = cl_loss(fm_s, fm_t, targets, fusion_true=True, multi_index=multi_index)
    ref_f = cl_ref(fm_s, fm_t, targets, fusion_true=True, multi_index=multi_index)
    jax.block_until_ready((out_nf, out_f))

    assert jnp.allclose(out_nf, ref_nf, rtol=1e-4, atol=1e-4), (out_nf, ref_nf)
    assert jnp.allclose(out_f, ref_f, rtol=1e-4, atol=1e-4), (out_f, ref_f)

    # --- test 2: unaligned shapes to exercise row/col padding (N=12, fusion M=20) ---
    N2, M2 = 12, 20
    fm_t2 = jax.random.normal(k5, (N2, D), dtype=jnp.float32)
    targets2 = jax.random.randint(k6, (N2,), 0, NUM_CLASSES, dtype=jnp.int32)
    fm_s2_nf = jax.random.normal(k7, (N2, D), dtype=jnp.float32)
    multi_index2 = jax.random.randint(k8, (M2,), 0, N2, dtype=jnp.int32)
    fm_s2_f = jax.random.normal(k7, (M2, D), dtype=jnp.float32)

    out2_nf = cl_loss(fm_s2_nf, fm_t2, targets2, fusion_true=False)
    ref2_nf = cl_ref(fm_s2_nf, fm_t2, targets2, fusion_true=False)
    out2_f = cl_loss(fm_s2_f, fm_t2, targets2, fusion_true=True, multi_index=multi_index2)
    ref2_f = cl_ref(fm_s2_f, fm_t2, targets2, fusion_true=True, multi_index=multi_index2)
    jax.block_until_ready((out2_nf, out2_f))

    assert jnp.allclose(out2_nf, ref2_nf, rtol=1e-4, atol=1e-4), (out2_nf, ref2_nf)
    assert jnp.allclose(out2_f, ref2_f, rtol=1e-4, atol=1e-4), (out2_f, ref2_f)

    print("KERNEL_OK")
</pallas_src>

<mosaic_0001>
module attributes {stable_mosaic.version = 11 : i64} {
  func.func @_cl_kernel(%arg0: i32, %arg1: i32, %arg2: memref<8x128xf32, #tpu.memory_space<vmem>>, %arg3: memref<128x256xf32, #tpu.memory_space<vmem>>, %arg4: memref<8x1xi32, #tpu.memory_space<vmem>>, %arg5: memref<1x128xi32, #tpu.memory_space<vmem>>, %arg6: memref<1x8x128xf32, #tpu.memory_space<vmem>>, %arg7: memref<8x256xf32, #tpu.memory_space<vmem>>) attributes {dimension_semantics = [#tpu.dimension_semantics<parallel>, #tpu.dimension_semantics<arbitrary>], iteration_bounds = array<i64: 1, 1>, scalar_prefetch = 0 : i64, scratch_operands = 1 : i64, tpu.core_type = #tpu.core_type<tc>, window_params = [{transform_indices = @transform_0, window_bounds = array<i64: 8, 128>}, {transform_indices = @transform_1, window_bounds = array<i64: 128, 256>}, {transform_indices = @transform_2, window_bounds = array<i64: 8, 1>}, {transform_indices = @transform_3, window_bounds = array<i64: 1, 128>}, {transform_indices = @transform_4, window_bounds = array<i64: 1, 8, 128>}]} {
    %c0_i32 = arith.constant 0 : i32
    %0 = arith.cmpi eq, %arg1, %c0_i32 : i32
    %1 = arith.extui %0 : i1 to i32
    %c0_i32_0 = arith.constant 0 : i32
    %2 = arith.cmpi ne, %1, %c0_i32_0 : i32
    scf.if %2 {
      %cst_12 = arith.constant 0.000000e+00 : f32
      %18 = vector.broadcast %cst_12 : f32 to vector<8x256xf32>
      %c0_13 = arith.constant 0 : index
      %c0_14 = arith.constant 0 : index
      %19 = vector.load %arg7[%c0_13, %c0_14] : memref<8x256xf32, #tpu.memory_space<vmem>>, vector<8x256xf32>
      tpu.vector_store %arg7[%c0_13, %c0_14], %18 {strides = array<i32>} : memref<8x256xf32, #tpu.memory_space<vmem>>, vector<8x256xf32>,
    } else {
    }
    %c0 = arith.constant 0 : index
    %c0_1 = arith.constant 0 : index
    %3 = vector.load %arg4[%c0, %c0_1] : memref<8x1xi32, #tpu.memory_space<vmem>>, vector<8x1xi32>
    %c0_2 = arith.constant 0 : index
    %c0_3 = arith.constant 0 : index
    %4 = vector.load %arg5[%c0_2, %c0_3] : memref<1x128xi32, #tpu.memory_space<vmem>>, vector<1x128xi32>
    %5 = vector.broadcast %3 : vector<8x1xi32> to vector<8x128xi32>
    %6 = vector.broadcast %4 : vector<1x128xi32> to vector<8x128xi32>
    %7 = arith.cmpi eq, %5, %6 : vector<8x128xi32>
    %8 = arith.extui %7 : vector<8x128xi1> to vector<8x128xi32>
    %9 = arith.sitofp %8 : vector<8x128xi32> to vector<8x128xf32>
    %c0_4 = arith.constant 0 : index
    %c0_5 = arith.constant 0 : index
    %10 = vector.load %arg7[%c0_4, %c0_5] : memref<8x256xf32, #tpu.memory_space<vmem>>, vector<8x256xf32>
    %c0_6 = arith.constant 0 : index
    %c0_7 = arith.constant 0 : index
    %11 = vector.load %arg3[%c0_6, %c0_7] : memref<128x256xf32, #tpu.memory_space<vmem>>, vector<128x256xf32>
    %cst = arith.constant dense<0.000000e+00> : vector<8x256xf32>
    %12 = tpu.matmul %9, %11, %cst {dimension_numbers = #tpu.dot_dimension_numbers<[1], [0], [0], [1], [0, 0, 1, 1], [], []>} : vector<8x128xf32>, vector<128x256xf32>, vector<8x256xf32> -> vector<8x256xf32>
    %13 = arith.addf %10, %12 : vector<8x256xf32>
    %c0_8 = arith.constant 0 : index
    %c0_9 = arith.constant 0 : index
    %14 = vector.load %arg7[%c0_8, %c0_9] : memref<8x256xf32, #tpu.memory_space<vmem>>, vector<8x256xf32>
    tpu.vector_store %arg7[%c0_8, %c0_9], %13 {strides = array<i32>} : memref<8x256xf32, #tpu.memory_space<vmem>>, vector<8x256xf32>,
    %c0_i32_10 = arith.constant 0 : i32
    %15 = arith.cmpi eq, %arg1, %c0_i32_10 : i32
    %16 = arith.extui %15 : i1 to i32
    %c0_i32_11 = arith.constant 0 : i32
    %17 = arith.cmpi ne, %16, %c0_i32_11 : i32
    scf.if %17 {
      %c0_12 = arith.constant 0 : index
      %c0_13 = arith.constant 0 : index
      %18 = vector.load %arg7[%c0_12, %c0_13] : memref<8x256xf32, #tpu.memory_space<vmem>>, vector<8x256xf32>
      %19 = vector.extract_strided_slice %18 {offsets = [0, 0], sizes = [8, 128], strides = [1, 1]} : vector<8x256xf32> to vector<8x128xf32>
      %20 = vector.extract_strided_slice %18 {offsets = [0, 128], sizes = [8, 1], strides = [1, 1]} : vector<8x256xf32> to vector<8x1xf32>
      %21 = vector.extract_strided_slice %18 {offsets = [0, 129], sizes = [8, 1], strides = [1, 1]} : vector<8x256xf32> to vector<8x1xf32>
      %c0_14 = arith.constant 0 : index
      %c0_15 = arith.constant 0 : index
      %22 = vector.load %arg2[%c0_14, %c0_15] : memref<8x128xf32, #tpu.memory_space<vmem>>, vector<8x128xf32>
      %23 = vector.broadcast %21 : vector<8x1xf32> to vector<8x128xf32>
      %24 = arith.mulf %22, %23 : vector<8x128xf32>
      %cst_16 = arith.constant 2.000000e+00 : f32
      %25 = vector.broadcast %cst_16 : f32 to vector<8x128xf32>
      %26 = arith.mulf %25, %19 : vector<8x128xf32>
      %27 = arith.subf %24, %26 : vector<8x128xf32>
      %28 = arith.mulf %22, %27 : vector<8x128xf32>
      %cst_17 = arith.constant dense<0.000000e+00> : vector<8xf32>
      %29 = vector.multi_reduction <add>, %28, %cst_17 [1] : vector<8x128xf32> to vector<8xf32>
      %30 = vector.shape_cast %29 : vector<8xf32> to vector<8x1xf32>
      %31 = arith.addf %30, %20 : vector<8x1xf32>
      %cst_18 = arith.constant 1.000000e+00 : f32
      %32 = vector.broadcast %cst_18 : f32 to vector<8x1xf32>
      %33 = arith.maximumf %21, %32 : vector<8x1xf32>
      %34 = arith.divf %31, %33 : vector<8x1xf32>
      %cst_19 = arith.constant dense<0.000000e+00> : vector<1xf32>
      %35 = vector.multi_reduction <add>, %34, %cst_19 [0] : vector<8x1xf32> to vector<1xf32>
      %36 = vector.shape_cast %35 : vector<1xf32> to vector<1x1xf32>
      %37 = vector.shape_cast %36 : vector<1x1xf32> to vector<1x1x1xf32>
      %38 = vector.shape_cast %37 : vector<1x1x1xf32> to vector<1x1x1xf32>
      %39 = vector.broadcast %38 : vector<1x1x1xf32> to vector<1x8x128xf32>
      %c0_20 = arith.constant 0 : index
      %c0_21 = arith.constant 0 : index
      %c0_22 = arith.constant 0 : index
      %40 = vector.load %arg6[%c0_20, %c0_21, %c0_22] : memref<1x8x128xf32, #tpu.memory_space<vmem>>, vector<1x8x128xf32>
      tpu.vector_store %arg6[%c0_20, %c0_21, %c0_22], %39 {strides = array<i32>} : memref<1x8x128xf32, #tpu.memory_space<vmem>>, vector<1x8x128xf32>,
    } else {
    }
    return
  }
  func.func @transform_0(%arg0: i32, %arg1: i32) -> (i32, i32) {
    %c0_i32 = arith.constant 0 : i32
    %c0_i32_0 = arith.constant 0 : i32
    return %arg0, %c0_i32 : i32, i32
  }
  func.func @transform_1(%arg0: i32, %arg1: i32) -> (i32, i32) {
    %c0_i32 = arith.constant 0 : i32
    %c0_i32_0 = arith.constant 0 : i32
    return %arg1, %c0_i32 : i32, i32
  }
  func.func @transform_2(%arg0: i32, %arg1: i32) -> (i32, i32) {
    %c0_i32 = arith.constant 0 : i32
    %c0_i32_0 = arith.constant 0 : i32
    return %arg0, %c0_i32 : i32, i32
  }
  func.func @transform_3(%arg0: i32, %arg1: i32) -> (i32, i32) {
    %c0_i32 = arith.constant 0 : i32
    %c0_i32_0 = arith.constant 0 : i32
    return %c0_i32, %arg1 : i32, i32
  }
  func.func @transform_4(%arg0: i32, %arg1: i32) -> (i32, i32, i32) {
    %c0_i32 = arith.constant 0 : i32
    %c0_i32_0 = arith.constant 0 : i32
    %c0_i32_1 = arith.constant 0 : i32
    return %arg0, %c0_i32, %c0_i32_0 : i32, i32, i32
  }
}

</mosaic_0001>

<llo_original>
// kernel: tpu_custom_call.1
$region0: #{tpu_custom_call.1}
  #allocation0 [shape = 'u32[]', space=smem, size = 0x4, offset = 0x4, fixed_abs, tag = 'smem constant byte address 0x4 - core index']
  #allocation1 [shape = 'u32[144,128]{1,0:T(1,128)}', space=vmem, size = 0x12000, scoped, tag = 'internal scratch']
  #allocation2 [shape = 'f32[8,256]{1,0:T(8,128)}', space=vmem, size = 0x2000, scoped, tag = 'scratch operand']
  %s0 = inlined_call_operand.hbm [shape: f32[8,128], index: 0, kind: input, shape index: {}]
  %s1 = inlined_call_operand.hbm [shape: f32[128,256], index: 1, kind: input, shape index: {}]
  %s2 = inlined_call_operand.hbm [shape: s32[8,1], index: 2, kind: input, shape index: {}]
  %s3 = inlined_call_operand.hbm [shape: s32[1,128], index: 3, kind: input, shape index: {}]
  %s4 = inlined_call_operand.hbm [shape: f32[1,8,128], index: 4, kind: output, shape index: {}]
  %s5 = sld [smem:[#allocation0]]
  $region50: #{tpu_custom_call.1} parent=0
    _
  %s7 = ssub.s32 1, %s5
  %s8 = scalar_select 0, %s7, %s5
  $region1: #{tpu_custom_call.1} parent=0
    #allocation3 [shape = 'u8[4096]{0}', space=vmem, size = 0x1000, scoped, tag = 'input window, operand 0, single buffered']
    #allocation4 [shape = 's32[1]{0}', space=sflag, size = 0x4, scoped, tag = 'scoped memory for tpu_custom_call.1']
    #allocation5 [shape = 's32[1]{0}', space=sflag, size = 0x4, scoped, tag = 'scoped memory for tpu_custom_call.1']
    #allocation6 [shape = 'u8[131072]{0}', space=vmem, size = 0x20000, scoped, tag = 'input window, operand 1, single buffered']
    #allocation7 [shape = 's32[1]{0}', space=sflag, size = 0x4, scoped, tag = 'scoped memory for tpu_custom_call.1']
    #allocation8 [shape = 'u8[4096]{0}', space=vmem, size = 0x1000, scoped, tag = 'input window, operand 2, single buffered']
    #allocation9 [shape = 'u8[512]{0}', space=vmem, size = 0x400, scoped, tag = 'input window, operand 3, single buffered']
    #allocation10 [shape = 's32[1]{0}', space=sflag, size = 0x4, scoped, tag = 'scoped memory for tpu_custom_call.1']
    #allocation11 [shape = 'u8[4096]{0}', space=vmem, size = 0x1000, scoped, tag = 'output window, operand 0, single buffered']
    %9 = vsyncpa [#allocation4], 0
    %10 = vsyncpa [#allocation7], 0
    %11 = vsyncpa [#allocation10], 0
    %12 = vsyncpa [#allocation5], 0
    // Predicated region
    $region2: #{tpu_custom_call.1} parent=1 // pred_check
      _
    $region3: #{tpu_custom_call.1} parent=1 // pred_check_branch
      %14 = sbr.rel (0) target = $region5
    $region4: #{tpu_custom_call.1} parent=1 // pred_region
      %s16 = ssub.s32 128, 128
      %17 = vsyncadd [#allocation4], %s16
      %s19 = sshll.u32 [#allocation3], 4
      %s20 = int_to_ptr.vmem [resolvable:$true] %s19
      %22 = dma.hbm_to_vmem [thread:$0]  %s0, 128, %s20, [#allocation4]
    $region5: #{tpu_custom_call.1} parent=1 // pred_fallthru
      _
    // Predicated region
    $region6: #{tpu_custom_call.1} parent=1 // pred_check
      _
    $region7: #{tpu_custom_call.1} parent=1 // pred_check_branch
      %24 = sbr.rel (0) target = $region9
    $region8: #{tpu_custom_call.1} parent=1 // pred_region
      %s26 = ssub.s32 4096, 4096
      %27 = vsyncadd [#allocation7], %s26
      %s28 = sshll.u32 [#allocation6], 4
      %s29 = int_to_ptr.vmem [resolvable:$true] %s28
      %34 = dma.hbm_to_vmem [thread:$0]  %s1, 4096, %s29, [#allocation7], 256, 256, 16
    $region9: #{tpu_custom_call.1} parent=1 // pred_fallthru
      _
    // Predicated region
    $region10: #{tpu_custom_call.1} parent=1 // pred_check
      _
    $region11: #{tpu_custom_call.1} parent=1 // pred_check_branch
      %36 = sbr.rel (0) target = $region13
    $region12: #{tpu_custom_call.1} parent=1 // pred_region
      %s38 = ssub.s32 128, 128
      %39 = vsyncadd [#allocation7], %s38
      %s41 = sshll.u32 [#allocation8], 4
      %s42 = int_to_ptr.vmem [resolvable:$true] %s41
      %44 = dma.hbm_to_vmem [thread:$0]  %s2, 128, %s42, [#allocation7]
    $region13: #{tpu_custom_call.1} parent=1 // pred_fallthru
      _
    // Predicated region
    $region14: #{tpu_custom_call.1} parent=1 // pred_check
      _
    $region15: #{tpu_custom_call.1} parent=1 // pred_check_branch
      %46 = sbr.rel (0) target = $region17
    $region16: #{tpu_custom_call.1} parent=1 // pred_region
      %s48 = ssub.s32 16, 16
      %49 = vsyncadd [#allocation10], %s48
      %s51 = sshll.u32 [#allocation9], 4
      %s52 = int_to_ptr.vmem [resolvable:$true] %s51
      %54 = dma.hbm_to_vmem [thread:$0]  %s3, 16, %s52, [#allocation10]
    $region17: #{tpu_custom_call.1} parent=1 // pred_fallthru
      _
    // Predicated region
    $region18: #{tpu_custom_call.1} parent=1 // pred_check
      _
    $region19: #{tpu_custom_call.1} parent=1 // pred_check_branch
      %56 = sbr.rel (0) target = $region21
    $region20: #{tpu_custom_call.1} parent=1 // pred_region
      %57 = dma.done [#allocation4], 128
    $region21: #{tpu_custom_call.1} parent=1 // pred_fallthru
      _
    // Predicated region
    $region22: #{tpu_custom_call.1} parent=1 // pred_check
      _
    $region23: #{tpu_custom_call.1} parent=1 // pred_check_branch
      %59 = sbr.rel (0) target = $region25
    $region24: #{tpu_custom_call.1} parent=1 // pred_region
      %60 = dma.done [#allocation7], 4096
    $region25: #{tpu_custom_call.1} parent=1 // pred_fallthru
      _
    // Predicated region
    $region26: #{tpu_custom_call.1} parent=1 // pred_check
      _
    $region27: #{tpu_custom_call.1} parent=1 // pred_check_branch
      %62 = sbr.rel (0) target = $region29
    $region28: #{tpu_custom_call.1} parent=1 // pred_region
      %63 = dma.done [#allocation7], 128
    $region29: #{tpu_custom_call.1} parent=1 // pred_fallthru
      _
    // Predicated region
    $region30: #{tpu_custom_call.1} parent=1 // pred_check
      _
    $region31: #{tpu_custom_call.1} parent=1 // pred_check_branch
      %65 = sbr.rel (0) target = $region33
    $region32: #{tpu_custom_call.1} parent=1 // pred_region
      %66 = dma.done [#allocation10], 16
    $region33: #{tpu_custom_call.1} parent=1 // pred_fallthru
      _
    %p67 = scmp.eq.s32.totalorder 0, 0
    // Predicated region
    $region34: #{tpu_custom_call.1} parent=1 // pred_check
      %p68 = pneg %p67
    $region35: #{tpu_custom_call.1} parent=1 // pred_check_branch
      %70 = sbr.rel (%p68) target = $region37
    $region36: #{tpu_custom_call.1} parent=1 // pred_region
      %71 = vst [vmem:[#allocation2] sm:$0xff] 0.0
      %72 = vst [vmem:[#allocation2 + $0x8] sm:$0xff] 0.0
    $region37: #{tpu_custom_call.1} parent=1 // pred_fallthru
      _
    %v73 = vld [vmem:[#allocation8] sm:$0xff]
    %v74 = vld [vmem:[#allocation9] sm:$0x1]
    %75 = vset.pattern.permute.xlu0 0
    %76 = vperm.xlu0 %75, %v73
    %v77 = vpop.permute.xlu0 %76
    %v78 = vlaneseq
    %v79 = vshrl.u32 %v78, 7
    %v80 = vsub.s32 0, %v79
    %v81 = vrot.slane %v74, %v80
    %vm82 = vcmp.eq.s32.totalorder %v77, %v81
    %v83 = vsel %vm82, 1, 0
    %v84 = vcvt.s32.f32 %v83
    %v85 = vld [vmem:[#allocation2] sm:$0xff]
    %v86 = vld [vmem:[#allocation2 + $0x8] sm:$0xff]
    %v87 = vld [vmem:[#allocation6] sm:$0xff]
    %v88 = vld [vmem:[#allocation6 + $0x8] sm:$0xff]
    %v89 = vld [vmem:[#allocation6 + $0x10] sm:$0xff]
    %v90 = vld [vmem:[#allocation6 + $0x18] sm:$0xff]
    %v91 = vld [vmem:[#allocation6 + $0x20] sm:$0xff]
    %v92 = vld [vmem:[#allocation6 + $0x28] sm:$0xff]
    %v93 = vld [vmem:[#allocation6 + $0x30] sm:$0xff]
    %v94 = vld [vmem:[#allocation6 + $0x38] sm:$0xff]
    %v95 = vld [vmem:[#allocation6 + $0x40] sm:$0xff]
    %v96 = vld [vmem:[#allocation6 + $0x48] sm:$0xff]
    %v97 = vld [vmem:[#allocation6 + $0x50] sm:$0xff]
    %v98 = vld [vmem:[#allocation6 + $0x58] sm:$0xff]
    %v99 = vld [vmem:[#allocation6 + $0x60] sm:$0xff]
    %v100 = vld [vmem:[#allocation6 + $0x68] sm:$0xff]
    %v101 = vld [vmem:[#allocation6 + $0x70] sm:$0xff]
    %v102 = vld [vmem:[#allocation6 + $0x78] sm:$0xff]
    %v103 = vld [vmem:[#allocation6 + $0x80] sm:$0xff]
    %v104 = vld [vmem:[#allocation6 + $0x88] sm:$0xff]
    %v105 = vld [vmem:[#allocation6 + $0x90] sm:$0xff]
    %v106 = vld [vmem:[#allocation6 + $0x98] sm:$0xff]
    %v107 = vld [vmem:[#allocation6 + $0xa0] sm:$0xff]
    %v108 = vld [vmem:[#allocation6 + $0xa8] sm:$0xff]
    %v109 = vld [vmem:[#allocation6 + $0xb0] sm:$0xff]
    %v110 = vld [vmem:[#allocation6 + $0xb8] sm:$0xff]
    %v111 = vld [vmem:[#allocation6 + $0xc0] sm:$0xff]
    %v112 = vld [vmem:[#allocation6 + $0xc8] sm:$0xff]
    %v113 = vld [vmem:[#allocation6 + $0xd0] sm:$0xff]
    %v114 = vld [vmem:[#allocation6 + $0xd8] sm:$0xff]
    %v115 = vld [vmem:[#allocation6 + $0xe0] sm:$0xff]
    %v116 = vld [vmem:[#allocation6 + $0xe8] sm:$0xff]
    %v117 = vld [vmem:[#allocation6 + $0xf0] sm:$0xff]
    %v118 = vld [vmem:[#allocation6 + $0xf8] sm:$0xff]
    %119 = vmatprep.subr.mxu0 %v88
    %120 = vmatpush1.msra.mxu0 %v87
    %121 = vmatprep.subr.mxu0 %v90
    %122 = vmatpush1.msra.mxu0 %v89
    %123 = vmatprep.subr.mxu0 %v92
    %124 = vmatpush1.msra.mxu0 %v91
    %125 = vmatprep.subr.mxu0 %v94
    %126 = vmatpush1.msra.mxu0 %v93
    %127 = vmatprep.subr.mxu0 %v96
    %128 = vmatpush1.msra.mxu0 %v95
    %129 = vmatprep.subr.mxu0 %v98
    %130 = vmatpush1.msra.mxu0 %v97
    %131 = vmatprep.subr.mxu0 %v100
    %132 = vmatpush1.msra.mxu0 %v99
    %133 = vmatprep.subr.mxu0 %v102
    %134 = vmatpush1.msra.mxu0 %v101
    %135 = vmatprep.subr.mxu0 %v104
    %136 = vmatpush1.msra.mxu0 %v103
    %137 = vmatprep.subr.mxu0 %v106
    %138 = vmatpush1.msra.mxu0 %v105
    %139 = vmatprep.subr.mxu0 %v108
    %140 = vmatpush1.msra.mxu0 %v107
    %141 = vmatprep.subr.mxu0 %v110
    %142 = vmatpush1.msra.mxu0 %v109
    %143 = vmatprep.subr.mxu0 %v112
    %144 = vmatpush1.msra.mxu0 %v111
    %145 = vmatprep.subr.mxu0 %v114
    %146 = vmatpush1.msra.mxu0 %v113
    %147 = vmatprep.subr.mxu0 %v116
    %148 = vmatpush1.msra.mxu0 %v115
    %149 = vmatprep.subr.mxu0 %v118
    %150 = vmatpush1.msra.mxu0 %v117
    %151 = vmatprep.subr.mxu0 0.0
    %152 = vmatpush1.msra.mxu0 0.0
    %153 = vmatprep.subr.mxu0 0.0
    %154 = vmatpush1.msra.mxu0 0.0
    %155 = vmatprep.subr.mxu0 0.0
    %156 = vmatpush1.msra.mxu0 0.0
    %157 = vmatprep.subr.mxu0 0.0
    %158 = vmatpush1.msra.mxu0 0.0
    %159 = vmatprep.subr.mxu0 0.0
    %160 = vmatpush1.msra.mxu0 0.0
    %161 = vmatprep.subr.mxu0 0.0
    %162 = vmatpush1.msra.mxu0 0.0
    %163 = vmatprep.subr.mxu0 0.0
    %164 = vmatpush1.msra.mxu0 0.0
    %165 = vmatprep.subr.mxu0 0.0
    %166 = vmatpush1.msra.mxu0 0.0
    %167 = vmatprep.subr.mxu0 0.0
    %168 = vmatpush1.msra.mxu0 0.0
    %169 = vmatprep.subr.mxu0 0.0
    %170 = vmatpush1.msra.mxu0 0.0
    %171 = vmatprep.subr.mxu0 0.0
    %172 = vmatpush1.msra.mxu0 0.0
    %173 = vmatprep.subr.mxu0 0.0
    %174 = vmatpush1.msra.mxu0 0.0
    %175 = vmatprep.subr.mxu0 0.0
    %176 = vmatpush1.msra.mxu0 0.0
    %177 = vmatprep.subr.mxu0 0.0
    %178 = vmatpush1.msra.mxu0 0.0
    %179 = vmatprep.subr.mxu0 0.0
    %180 = vmatpush1.msra.mxu0 0.0
    %181 = vmatprep.subr.mxu0 0.0
    %182 = vmatpush1.msra.mxu0 0.0
    %183 = vmatprep.mubr.f32.mxu0 0.0
    %184 = vmatmul.mubr.f32.gmra.mrb[0].mxu0 %v84
    %v185 = vpop.f32.mrb[0].mxu0
    %v186 = vadd.f32 0.0, %v185
    %v187 = vpop.f32.mrb[0].mxu0
    %v188 = vadd.f32 0.0, %v187
    %189 = vdwg.mxu0
    %v190 = vadd.f32 %v85, %v186
    %v191 = vadd.f32 %v86, %v188
    %192 = vst [vmem:[#allocation2] sm:$0xff] %v190
    %193 = vst [vmem:[#allocation2 + $0x8] sm:$0xff] %v191
    // Predicated region
    $region38: #{tpu_custom_call.1} parent=1 // pred_check
      %p194 = pneg %p67
    $region39: #{tpu_custom_call.1} parent=1 // pred_check_branch
      %196 = sbr.rel (%p194) target = $region41
    $region40: #{tpu_custom_call.1} parent=1 // pred_region
      %v197 = vld [vmem:[#allocation2] sm:$0xff]
      %v198 = vld [vmem:[#allocation2 + $0x8] sm:$0xff]
      %v199 = vld [vmem:[#allocation3] sm:$0xff]
      %201 = vset.pattern.permute.xlu0 1
      %202 = vperm.xlu0 %201, %v198
      %v203 = vpop.permute.xlu0 %202
      %v205 = vmul.f32 %v199, %v203
      %v206 = vmul.f32 %v197, 2.0
      %v207 = vsub.f32 %v205, %v206
      %v208 = vmul.f32 %v199, %v207
      %209 = vadd.xlane.f32.xlu0 %v208
      %v210 = vpop.xlane.xlu0 %209
      %v211 = vadd.f32 %v210, %v198
      %v212 = vmax.f32 %v198, 1.0
      %214 = vrot.lane.b32.xlu0 %v212, 127
      %v215 = vpop.permute.xlu0 %214
      %v217 = vrcp.pop %v215
      %v218 = vmul.f32 %v211, %v217
      %vm219 = vcmask 7168
      %v220 = vsel %vm219, %v218, 0.0
      %v221 = vrot.slane %v220, 4
      %v222 = vadd.f32 %v220, %v221
      %v223 = vrot.slane %v222, 2
      %v224 = vadd.f32 %v222, %v223
      %v225 = vrot.slane %v224, 1
      %v226 = vadd.f32 %v224, %v225
      %228 = vset.pattern.permute.xlu0 0
      %229 = vperm.xlu0 %228, %v226
      %v230 = vpop.permute.xlu0 %229
      %232 = vst [vmem:[#allocation11] sm:$0xff] %v230
    $region41: #{tpu_custom_call.1} parent=1 // pred_fallthru
      _
    // Predicated region
    $region42: #{tpu_custom_call.1} parent=1 // pred_check
      _
    $region43: #{tpu_custom_call.1} parent=1 // pred_check_branch
      %234 = sbr.rel (0) target = $region45
    $region44: #{tpu_custom_call.1} parent=1 // pred_region
      %s236 = ssub.s32 128, 128
      %237 = vsyncadd [#allocation5], %s236
      %s239 = sshll.u32 [#allocation11], 4
      %s240 = int_to_ptr.vmem [resolvable:$true] %s239
      %242 = dma.vmem_to_hbm [thread:$0]  %s240, 128, %s4, [#allocation5]
    $region45: #{tpu_custom_call.1} parent=1 // pred_fallthru
      _
    // Predicated region
    $region46: #{tpu_custom_call.1} parent=1 // pred_check
      _
    $region47: #{tpu_custom_call.1} parent=1 // pred_check_branch
      %244 = sbr.rel (0) target = $region49
    $region48: #{tpu_custom_call.1} parent=1 // pred_region
      %245 = dma.done [#allocation5], 128
    $region49: #{tpu_custom_call.1} parent=1 // pred_fallthru
      _
    %246 = vsyncpa [#allocation4], 1
    %247 = vsyncpa [#allocation7], 1
    %248 = vsyncpa [#allocation10], 1
    %249 = vsyncpa [#allocation5], 1

</llo_original>
